<compile_context>
chip_gen: v7x
topology: tpu7x:2x2x1
jax: 0.10.0
libtpu: 0.0.40
codegen_flags: <defaults>
</compile_context>

<pallas_src>
import functools

import jax
import jax.numpy as jnp
from jax.experimental import pallas as pl
from jax.experimental.pallas import tpu as pltpu

BN_EPS = 1e-5
LANE = 128
SUBLANE = 8


# ------------------------------- small utils ------------------------------- #

def _round_up(x, m):
    return (x + m - 1) // m * m


def _pad2d(a, rows, cols):
    return jnp.pad(a, ((0, rows - a.shape[0]), (0, cols - a.shape[1])))


# ------------------------------ Pallas kernel ------------------------------ #

def _make_fused_mlp_kernel(n_layers):
    """Fused (Linear[+foldedBN]+ReLU) * (n-1) -> Linear -> Sigmoid kernel.

    Ref order: x, (w1, b1), ..., (wn, bn), out.  Weights are bf16 (in, out),
    biases f32 (1, out).  All intermediates stay in VMEM/vregs.
    """

    def kernel(*refs):
        x_ref, o_ref = refs[0], refs[-1]
        wb = refs[1:-1]
        h = x_ref[...]                               # f32 (tb, in_pad)
        for li in range(n_layers):
            w_ref = wb[2 * li]
            b_ref = wb[2 * li + 1]
            # MXU in bf16, accumulate in f32; bias/activation math in f32.
            h = jnp.dot(h.astype(jnp.bfloat16), w_ref[...],
                        preferred_element_type=jnp.float32)
            h = h + b_ref[...]
            if li < n_layers - 1:
                h = jnp.maximum(h, 0.0)              # ReLU (Dropout = identity)
        # Sigmoid: exp + approx reciprocal both live on the EUP slot.
        o_ref[...] = pl.reciprocal(1.0 + jnp.exp(-h), approx=True)

    return kernel


# --------------------------- Parameter construction ------------------------ #

def init_mlp_params(key, layer_sizes):
    """Match nn.Linear default init (U(-1/sqrt(in), 1/sqrt(in))) and a freshly
    constructed BatchNorm1d (gamma=1, beta=0, running mean=0, running var=1)."""
    params = []
    n_layers = len(layer_sizes) - 1
    for i in range(n_layers):
        in_f, out_f = layer_sizes[i], layer_sizes[i + 1]
        key, kw, kb = jax.random.split(key, 3)
        bound = 1.0 / float(in_f) ** 0.5
        w = jax.random.uniform(kw, (out_f, in_f), jnp.float32, -bound, bound)
        b = jax.random.uniform(kb, (out_f,), jnp.float32, -bound, bound)
        layer = {"w": w, "b": b}
        if i < n_layers - 1:
            layer.update(
                gamma=jnp.ones((out_f,), jnp.float32),
                beta=jnp.zeros((out_f,), jnp.float32),
                mean=jnp.zeros((out_f,), jnp.float32),
                var=jnp.ones((out_f,), jnp.float32),
            )
        params.append(layer)
    return params


def prepare_fused_params(params):
    """Fold eval-mode BN into the Linear, transpose to (in, out), zero-pad
    feature dims to multiples of 128, cast weights to bf16 (biases stay f32)."""
    fused = []
    for layer in params:
        w_t = layer["w"].T.astype(jnp.float32)                 # (in, out)
        b = layer["b"].astype(jnp.float32)
        if "gamma" in layer:
            scale = layer["gamma"] * jax.lax.rsqrt(layer["var"] + BN_EPS)
            w_t = w_t * scale[None, :]
            b = (b - layer["mean"]) * scale + layer["beta"]
        in_p = _round_up(w_t.shape[0], LANE)
        out_p = _round_up(w_t.shape[1], LANE)
        w_pad = _pad2d(w_t, in_p, out_p).astype(jnp.bfloat16)
        b_pad = jnp.pad(b, (0, out_p - b.shape[0])).reshape(1, out_p)
        fused.append((w_pad, b_pad))
    return tuple(fused)


# ------------------------------ forward wrapper ----------------------------- #

@functools.partial(jax.jit, static_argnums=(2, 3))
def mlp_forward(x, fused_params, out_features, batch_tile=256):
    """Run the fused MLP. x: (batch, in_features) f32. Returns (batch, out)."""
    batch, _ = x.shape
    n_layers = len(fused_params)
    in_pad = fused_params[0][0].shape[0]
    out_pad = fused_params[-1][0].shape[1]

    # Batch tile: large for real batches, padded-to-8-sublanes for tiny ones.
    tb = batch_tile if batch >= batch_tile else _round_up(batch, SUBLANE)
    batch_pad = _round_up(batch, tb)
    x_p = _pad2d(x.astype(jnp.float32), batch_pad, in_pad)

    grid = (batch_pad // tb,)

    in_specs = [pl.BlockSpec((tb, in_pad), lambda i: (i, 0))]
    args = [x_p]
    for w, b in fused_params:
        in_specs.append(pl.BlockSpec(w.shape, lambda i: (0, 0)))   # resident
        in_specs.append(pl.BlockSpec(b.shape, lambda i: (0, 0)))   # resident
        args.extend((w, b))

    out = pl.pallas_call(
        _make_fused_mlp_kernel(n_layers),
        out_shape=jax.ShapeDtypeStruct((batch_pad, out_pad), jnp.float32),
        grid=grid,
        in_specs=in_specs,
        out_specs=pl.BlockSpec((tb, out_pad), lambda i: (i, 0)),
        compiler_params=pltpu.CompilerParams(
            dimension_semantics=("parallel",)),
    )(*args)

    return out[:batch, :out_features]


# ----------------------------- pure-JAX reference --------------------------- #

def mlp_reference(x, params):
    h = x
    n = len(params)
    for i, layer in enumerate(params):
        h = h @ layer["w"].T + layer["b"]
        if i < n - 1:
            inv_std = jax.lax.rsqrt(layer["var"] + BN_EPS)
            h = (h - layer["mean"]) * inv_std * layer["gamma"] + layer["beta"]
            h = jnp.maximum(h, 0.0)
    return jax.nn.sigmoid(h)


# ---------------------------------- Main ----------------------------------- #

if __name__ == "__main__":
    layer_sizes = [32, 64, 32, 1]   # typical fraud-detection MLP architecture
    batch = 8

    key = jax.random.PRNGKey(0)
    key, kx = jax.random.split(key)
    x = jax.random.normal(kx, (batch, layer_sizes[0]), jnp.float32)

    params = init_mlp_params(key, layer_sizes)
    fused = prepare_fused_params(params)

    out = mlp_forward(x, fused, layer_sizes[-1], 256)
    out = jax.block_until_ready(out)

    ref = mlp_reference(x, params)

    assert out.shape == (batch, layer_sizes[-1])
    assert bool(jnp.all(jnp.isfinite(out)))
    assert bool(jnp.allclose(out, ref, atol=5e-2, rtol=5e-2))
    print("KERNEL_OK")
</pallas_src>

<mosaic_0001>
module attributes {stable_mosaic.version = 11 : i64} {
  func.func @kernel(%arg0: i32, %arg1: memref<8x128xf32, #tpu.memory_space<vmem>>, %arg2: memref<128x128xbf16, #tpu.memory_space<vmem>>, %arg3: memref<1x128xf32, #tpu.memory_space<vmem>>, %arg4: memref<128x128xbf16, #tpu.memory_space<vmem>>, %arg5: memref<1x128xf32, #tpu.memory_space<vmem>>, %arg6: memref<128x128xbf16, #tpu.memory_space<vmem>>, %arg7: memref<1x128xf32, #tpu.memory_space<vmem>>, %arg8: memref<8x128xf32, #tpu.memory_space<vmem>>) attributes {dimension_semantics = [#tpu.dimension_semantics<parallel>], iteration_bounds = array<i64: 1>, scalar_prefetch = 0 : i64, scratch_operands = 0 : i64, tpu.core_type = #tpu.core_type<tc>, window_params = [{transform_indices = @transform_0, window_bounds = array<i64: 8, 128>}, {pipeline_mode = #tpu.pipeline_mode<synchronous>, transform_indices = @transform_1, window_bounds = array<i64: 128, 128>}, {pipeline_mode = #tpu.pipeline_mode<synchronous>, transform_indices = @transform_2, window_bounds = array<i64: 1, 128>}, {pipeline_mode = #tpu.pipeline_mode<synchronous>, transform_indices = @transform_3, window_bounds = array<i64: 128, 128>}, {pipeline_mode = #tpu.pipeline_mode<synchronous>, transform_indices = @transform_4, window_bounds = array<i64: 1, 128>}, {pipeline_mode = #tpu.pipeline_mode<synchronous>, transform_indices = @transform_5, window_bounds = array<i64: 128, 128>}, {pipeline_mode = #tpu.pipeline_mode<synchronous>, transform_indices = @transform_6, window_bounds = array<i64: 1, 128>}, {transform_indices = @transform_7, window_bounds = array<i64: 8, 128>}]} {
    %c0 = arith.constant 0 : index
    %c0_0 = arith.constant 0 : index
    %0 = vector.load %arg1[%c0, %c0_0] : memref<8x128xf32, #tpu.memory_space<vmem>>, vector<8x128xf32>
    %1 = arith.truncf %0 : vector<8x128xf32> to vector<8x128xbf16>
    %c0_1 = arith.constant 0 : index
    %c0_2 = arith.constant 0 : index
    %2 = vector.load %arg2[%c0_1, %c0_2] : memref<128x128xbf16, #tpu.memory_space<vmem>>, vector<128x128xbf16>
    %cst = arith.constant dense<0.000000e+00> : vector<8x128xf32>
    %3 = tpu.matmul %1, %2, %cst {dimension_numbers = #tpu.dot_dimension_numbers<[1], [0], [0], [1], [0, 0, 1, 1], [], []>} : vector<8x128xbf16>, vector<128x128xbf16>, vector<8x128xf32> -> vector<8x128xf32>
    %c0_3 = arith.constant 0 : index
    %c0_4 = arith.constant 0 : index
    %4 = vector.load %arg3[%c0_3, %c0_4] : memref<1x128xf32, #tpu.memory_space<vmem>>, vector<1x128xf32>
    %5 = vector.broadcast %4 : vector<1x128xf32> to vector<8x128xf32>
    %6 = arith.addf %3, %5 : vector<8x128xf32>
    %cst_5 = arith.constant 0.000000e+00 : f32
    %7 = vector.broadcast %cst_5 : f32 to vector<8x128xf32>
    %8 = arith.maximumf %6, %7 : vector<8x128xf32>
    %9 = arith.truncf %8 : vector<8x128xf32> to vector<8x128xbf16>
    %c0_6 = arith.constant 0 : index
    %c0_7 = arith.constant 0 : index
    %10 = vector.load %arg4[%c0_6, %c0_7] : memref<128x128xbf16, #tpu.memory_space<vmem>>, vector<128x128xbf16>
    %cst_8 = arith.constant dense<0.000000e+00> : vector<8x128xf32>
    %11 = tpu.matmul %9, %10, %cst_8 {dimension_numbers = #tpu.dot_dimension_numbers<[1], [0], [0], [1], [0, 0, 1, 1], [], []>} : vector<8x128xbf16>, vector<128x128xbf16>, vector<8x128xf32> -> vector<8x128xf32>
    %c0_9 = arith.constant 0 : index
    %c0_10 = arith.constant 0 : index
    %12 = vector.load %arg5[%c0_9, %c0_10] : memref<1x128xf32, #tpu.memory_space<vmem>>, vector<1x128xf32>
    %13 = vector.broadcast %12 : vector<1x128xf32> to vector<8x128xf32>
    %14 = arith.addf %11, %13 : vector<8x128xf32>
    %cst_11 = arith.constant 0.000000e+00 : f32
    %15 = vector.broadcast %cst_11 : f32 to vector<8x128xf32>
    %16 = arith.maximumf %14, %15 : vector<8x128xf32>
    %17 = arith.truncf %16 : vector<8x128xf32> to vector<8x128xbf16>
    %c0_12 = arith.constant 0 : index
    %c0_13 = arith.constant 0 : index
    %18 = vector.load %arg6[%c0_12, %c0_13] : memref<128x128xbf16, #tpu.memory_space<vmem>>, vector<128x128xbf16>
    %cst_14 = arith.constant dense<0.000000e+00> : vector<8x128xf32>
    %19 = tpu.matmul %17, %18, %cst_14 {dimension_numbers = #tpu.dot_dimension_numbers<[1], [0], [0], [1], [0, 0, 1, 1], [], []>} : vector<8x128xbf16>, vector<128x128xbf16>, vector<8x128xf32> -> vector<8x128xf32>
    %c0_15 = arith.constant 0 : index
    %c0_16 = arith.constant 0 : index
    %20 = vector.load %arg7[%c0_15, %c0_16] : memref<1x128xf32, #tpu.memory_space<vmem>>, vector<1x128xf32>
    %21 = vector.broadcast %20 : vector<1x128xf32> to vector<8x128xf32>
    %22 = arith.addf %19, %21 : vector<8x128xf32>
    %cst_17 = arith.constant 0.000000e+00 : f32
    %23 = vector.broadcast %cst_17 : f32 to vector<8x128xf32>
    %24 = arith.subf %23, %22 : vector<8x128xf32>
    %25 = math.exp %24 : vector<8x128xf32>
    %cst_18 = arith.constant 1.000000e+00 : f32
    %26 = vector.broadcast %cst_18 : f32 to vector<8x128xf32>
    %27 = arith.addf %26, %25 : vector<8x128xf32>
    %28 = tpu.reciprocal %27 {approx = true} : vector<8x128xf32> -> vector<8x128xf32>
    %c0_19 = arith.constant 0 : index
    %c0_20 = arith.constant 0 : index
    %29 = vector.load %arg8[%c0_19, %c0_20] : memref<8x128xf32, #tpu.memory_space<vmem>>, vector<8x128xf32>
    tpu.vector_store %arg8[%c0_19, %c0_20], %28 {strides = array<i32>} : memref<8x128xf32, #tpu.memory_space<vmem>>, vector<8x128xf32>,
    return
  }
  func.func @transform_0(%arg0: i32) -> (i32, i32) {
    %c0_i32 = arith.constant 0 : i32
    %c0_i32_0 = arith.constant 0 : i32
    return %arg0, %c0_i32 : i32, i32
  }
  func.func @transform_1(%arg0: i32) -> (i32, i32) {
    %c0_i32 = arith.constant 0 : i32
    %c0_i32_0 = arith.constant 0 : i32
    %c0_i32_1 = arith.constant 0 : i32
    return %c0_i32, %c0_i32_0 : i32, i32
  }
  func.func @transform_2(%arg0: i32) -> (i32, i32) {
    %c0_i32 = arith.constant 0 : i32
    %c0_i32_0 = arith.constant 0 : i32
    %c0_i32_1 = arith.constant 0 : i32
    return %c0_i32, %c0_i32_0 : i32, i32
  }
  func.func @transform_3(%arg0: i32) -> (i32, i32) {
    %c0_i32 = arith.constant 0 : i32
    %c0_i32_0 = arith.constant 0 : i32
    %c0_i32_1 = arith.constant 0 : i32
    return %c0_i32, %c0_i32_0 : i32, i32
  }
  func.func @transform_4(%arg0: i32) -> (i32, i32) {
    %c0_i32 = arith.constant 0 : i32
    %c0_i32_0 = arith.constant 0 : i32
    %c0_i32_1 = arith.constant 0 : i32
    return %c0_i32, %c0_i32_0 : i32, i32
  }
  func.func @transform_5(%arg0: i32) -> (i32, i32) {
    %c0_i32 = arith.constant 0 : i32
    %c0_i32_0 = arith.constant 0 : i32
    %c0_i32_1 = arith.constant 0 : i32
    return %c0_i32, %c0_i32_0 : i32, i32
  }
  func.func @transform_6(%arg0: i32) -> (i32, i32) {
    %c0_i32 = arith.constant 0 : i32
    %c0_i32_0 = arith.constant 0 : i32
    %c0_i32_1 = arith.constant 0 : i32
    return %c0_i32, %c0_i32_0 : i32, i32
  }
  func.func @transform_7(%arg0: i32) -> (i32, i32) {
    %c0_i32 = arith.constant 0 : i32
    %c0_i32_0 = arith.constant 0 : i32
    return %arg0, %c0_i32 : i32, i32
  }
}

</mosaic_0001>

<llo_original>
// kernel: mlp_forward.1
$region0: #{mlp_forward.1}
  #allocation0 [shape = 'u32[]', space=smem, size = 0x4, offset = 0x4, fixed_abs, tag = 'smem constant byte address 0x4 - core index']
  #allocation1 [shape = 'u32[144,128]{1,0:T(1,128)}', space=vmem, size = 0x12000, scoped, tag = 'internal scratch']
  %s0 = inlined_call_operand.vmem [shape: f32[8,128], index: 0, kind: input, shape index: {}]
  %s1 = inlined_call_operand.hbm [shape: bf16[128,128], index: 1, kind: input, shape index: {}]
  %s2 = inlined_call_operand.vmem [shape: f32[1,128], index: 2, kind: input, shape index: {}]
  %s3 = inlined_call_operand.hbm [shape: bf16[128,128], index: 3, kind: input, shape index: {}]
  %s4 = inlined_call_operand.vmem [shape: f32[1,128], index: 4, kind: input, shape index: {}]
  %s5 = inlined_call_operand.hbm [shape: bf16[128,128], index: 5, kind: input, shape index: {}]
  %s6 = inlined_call_operand.vmem [shape: f32[1,128], index: 6, kind: input, shape index: {}]
  %s7 = inlined_call_operand.vmem [shape: f32[8,128], index: 7, kind: output, shape index: {}]
  %s8 = sld [smem:[#allocation0]]
  $region50: #{mlp_forward.1} parent=0
    _
  %s10 = ssub.s32 1, %s8
  %s11 = scalar_select 0, %s10, %s8
  $region1: #{mlp_forward.1} parent=0
    #allocation2 [shape = 'u8[32768]{0}', space=vmem, size = 0x8000, scoped, tag = 'input window, operand 1, single buffered']
    #allocation3 [shape = 's32[1]{0}', space=sflag, size = 0x4, scoped, tag = 'scoped memory for mlp_forward.1']
    #allocation4 [shape = 'u8[32768]{0}', space=vmem, size = 0x8000, scoped, tag = 'input window, operand 3, single buffered']
    #allocation5 [shape = 's32[1]{0}', space=sflag, size = 0x4, scoped, tag = 'scoped memory for mlp_forward.1']
    #allocation6 [shape = 'u8[32768]{0}', space=vmem, size = 0x8000, scoped, tag = 'input window, operand 5, single buffered']
    %12 = vsyncpa [#allocation3], 0
    %13 = vsyncpa [#allocation5], 0
    // Predicated region
    $region2: #{mlp_forward.1} parent=1 // pred_check
      _
    $region3: #{mlp_forward.1} parent=1 // pred_check_branch
      %15 = sbr.rel (0) target = $region5
    $region4: #{mlp_forward.1} parent=1 // pred_region
      _
    $region5: #{mlp_forward.1} parent=1 // pred_fallthru
      _
    // Predicated region
    $region6: #{mlp_forward.1} parent=1 // pred_check
      _
    $region7: #{mlp_forward.1} parent=1 // pred_check_branch
      %17 = sbr.rel (0) target = $region9
    $region8: #{mlp_forward.1} parent=1 // pred_region
      %s19 = ssub.s32 1024, 1024
      %20 = vsyncadd [#allocation3], %s19
      %s21 = sshll.u32 [#allocation2], 4
      %s22 = int_to_ptr.vmem [resolvable:$true] %s21
      %27 = dma.hbm_to_vmem [thread:$0]  %s1, 1024, %s22, [#allocation3], 64, 64, 4
    $region9: #{mlp_forward.1} parent=1 // pred_fallthru
      _
    // Predicated region
    $region10: #{mlp_forward.1} parent=1 // pred_check
      _
    $region11: #{mlp_forward.1} parent=1 // pred_check_branch
      %29 = sbr.rel (0) target = $region13
    $region12: #{mlp_forward.1} parent=1 // pred_region
      _
    $region13: #{mlp_forward.1} parent=1 // pred_fallthru
      _
    // Predicated region
    $region14: #{mlp_forward.1} parent=1 // pred_check
      _
    $region15: #{mlp_forward.1} parent=1 // pred_check_branch
      %31 = sbr.rel (0) target = $region17
    $region16: #{mlp_forward.1} parent=1 // pred_region
      %s33 = ssub.s32 1024, 1024
      %34 = vsyncadd [#allocation5], %s33
      %s35 = sshll.u32 [#allocation4], 4
      %s36 = int_to_ptr.vmem [resolvable:$true] %s35
      %41 = dma.hbm_to_vmem [thread:$0]  %s3, 1024, %s36, [#allocation5], 64, 64, 4
    $region17: #{mlp_forward.1} parent=1 // pred_fallthru
      _
    // Predicated region
    $region18: #{mlp_forward.1} parent=1 // pred_check
      _
    $region19: #{mlp_forward.1} parent=1 // pred_check_branch
      %43 = sbr.rel (0) target = $region21
    $region20: #{mlp_forward.1} parent=1 // pred_region
      _
    $region21: #{mlp_forward.1} parent=1 // pred_fallthru
      _
    // Predicated region
    $region22: #{mlp_forward.1} parent=1 // pred_check
      _
    $region23: #{mlp_forward.1} parent=1 // pred_check_branch
      %45 = sbr.rel (0) target = $region25
    $region24: #{mlp_forward.1} parent=1 // pred_region
      %s47 = ssub.s32 1024, 1024
      %48 = vsyncadd [#allocation5], %s47
      %s49 = sshll.u32 [#allocation6], 4
      %s50 = int_to_ptr.vmem [resolvable:$true] %s49
      %55 = dma.hbm_to_vmem [thread:$0]  %s5, 1024, %s50, [#allocation5], 64, 64, 4
    $region25: #{mlp_forward.1} parent=1 // pred_fallthru
      _
    // Predicated region
    $region26: #{mlp_forward.1} parent=1 // pred_check
      _
    $region27: #{mlp_forward.1} parent=1 // pred_check_branch
      %57 = sbr.rel (0) target = $region29
    $region28: #{mlp_forward.1} parent=1 // pred_region
      _
    $region29: #{mlp_forward.1} parent=1 // pred_fallthru
      _
    // Predicated region
    $region30: #{mlp_forward.1} parent=1 // pred_check
      _
    $region31: #{mlp_forward.1} parent=1 // pred_check_branch
      %59 = sbr.rel (0) target = $region33
    $region32: #{mlp_forward.1} parent=1 // pred_region
      %60 = dma.done [#allocation3], 1024
    $region33: #{mlp_forward.1} parent=1 // pred_fallthru
      _
    // Predicated region
    $region34: #{mlp_forward.1} parent=1 // pred_check
      _
    $region35: #{mlp_forward.1} parent=1 // pred_check_branch
      %62 = sbr.rel (0) target = $region37
    $region36: #{mlp_forward.1} parent=1 // pred_region
      %63 = dma.done [#allocation5], 1024
    $region37: #{mlp_forward.1} parent=1 // pred_fallthru
      _
    // Predicated region
    $region38: #{mlp_forward.1} parent=1 // pred_check
      _
    $region39: #{mlp_forward.1} parent=1 // pred_check_branch
      %65 = sbr.rel (0) target = $region41
    $region40: #{mlp_forward.1} parent=1 // pred_region
      %66 = dma.done [#allocation5], 1024
    $region41: #{mlp_forward.1} parent=1 // pred_fallthru
      _
    %v68 = vld [vmem:[%s0] sm:$0xff]
    %v69 = vpack.c.bf16 %v68, %v68
    %v70 = vld [vmem:[#allocation2] sm:$0xf]
    %v71 = vld [vmem:[#allocation2 + $0x4] sm:$0xf]
    %v72 = vld [vmem:[#allocation2 + $0x8] sm:$0xf]
    %v73 = vld [vmem:[#allocation2 + $0xc] sm:$0xf]
    %v74 = vld [vmem:[#allocation2 + $0x10] sm:$0xf]
    %v75 = vld [vmem:[#allocation2 + $0x14] sm:$0xf]
    %v76 = vld [vmem:[#allocation2 + $0x18] sm:$0xf]
    %v77 = vld [vmem:[#allocation2 + $0x1c] sm:$0xf]
    %v78 = vld [vmem:[#allocation2 + $0x20] sm:$0xf]
    %v79 = vld [vmem:[#allocation2 + $0x24] sm:$0xf]
    %v80 = vld [vmem:[#allocation2 + $0x28] sm:$0xf]
    %v81 = vld [vmem:[#allocation2 + $0x2c] sm:$0xf]
    %v82 = vld [vmem:[#allocation2 + $0x30] sm:$0xf]
    %v83 = vld [vmem:[#allocation2 + $0x34] sm:$0xf]
    %v84 = vld [vmem:[#allocation2 + $0x38] sm:$0xf]
    %v85 = vld [vmem:[#allocation2 + $0x3c] sm:$0xf]
    %v86 = vld [vmem:[%s2] sm:$0x1]
    %v88 = vlaneseq
    %v89 = vshrl.u32 %v88, 7
    %v90 = vsub.s32 0, %v89
    %v91 = vrot.slane %v86, %v90
    %v109 = vunpack.c.l.b16 %v70
    %v110 = vunpack.c.l.b16 %v71
    %v111 = vunpack.c.l.b16 %v72
    %v112 = vunpack.c.l.b16 %v73
    %v113 = vunpack.c.l.b16 %v74
    %v114 = vunpack.c.l.b16 %v75
    %v115 = vunpack.c.l.b16 %v76
    %v116 = vunpack.c.l.b16 %v77
    %v117 = vunpack.c.l.b16 %v78
    %v118 = vunpack.c.l.b16 %v79
    %v119 = vunpack.c.l.b16 %v80
    %v120 = vunpack.c.l.b16 %v81
    %v121 = vunpack.c.l.b16 %v82
    %v122 = vunpack.c.l.b16 %v83
    %v123 = vunpack.c.l.b16 %v84
    %v124 = vunpack.c.l.b16 %v85
    %v125 = vpack.c.b16 %v110, %v109
    %v126 = vpack.c.b16 %v112, %v111
    %v127 = vpack.c.b16 %v114, %v113
    %v128 = vpack.c.b16 %v116, %v115
    %v129 = vpack.c.b16 %v118, %v117
    %v130 = vpack.c.b16 %v120, %v119
    %v131 = vpack.c.b16 %v122, %v121
    %v132 = vpack.c.b16 %v124, %v123
    %141 = vmatprep.subr.bf16.mxu0 0
    %142 = vmatpush1.bf16.msra.mxu0 %v125
    %143 = vmatprep.subr.bf16.mxu0 0
    %144 = vmatpush1.bf16.msra.mxu0 %v126
    %145 = vmatprep.subr.bf16.mxu0 0
    %146 = vmatpush1.bf16.msra.mxu0 %v127
    %147 = vmatprep.subr.bf16.mxu0 0
    %148 = vmatpush1.bf16.msra.mxu0 %v128
    %149 = vmatprep.subr.bf16.mxu0 0
    %150 = vmatpush1.bf16.msra.mxu0 %v129
    %151 = vmatprep.subr.bf16.mxu0 0
    %152 = vmatpush1.bf16.msra.mxu0 %v130
    %153 = vmatprep.subr.bf16.mxu0 0
    %154 = vmatpush1.bf16.msra.mxu0 %v131
    %155 = vmatprep.subr.bf16.mxu0 0
    %156 = vmatpush1.bf16.msra.mxu0 %v132
    %157 = vmatprep.subr.bf16.mxu0 0
    %158 = vmatpush1.bf16.msra.mxu0 0
    %159 = vmatprep.subr.bf16.mxu0 0
    %160 = vmatpush1.bf16.msra.mxu0 0
    %161 = vmatprep.subr.bf16.mxu0 0
    %162 = vmatpush1.bf16.msra.mxu0 0
    %163 = vmatprep.subr.bf16.mxu0 0
    %164 = vmatpush1.bf16.msra.mxu0 0
    %165 = vmatprep.subr.bf16.mxu0 0
    %166 = vmatpush1.bf16.msra.mxu0 0
    %167 = vmatprep.subr.bf16.mxu0 0
    %168 = vmatpush1.bf16.msra.mxu0 0
    %169 = vmatprep.subr.bf16.mxu0 0
    %170 = vmatpush1.bf16.msra.mxu0 0
    %171 = vmatprep.subr.bf16.mxu0 0
    %172 = vmatpush1.bf16.msra.mxu0 0
    %173 = vmatprep.mubr.bf16.mxu0 0
    %174 = vmatmul.mubr.bf16.gmra.mrb[0].mxu0 %v69
    %v175 = vpop.f32.mrb[0].mxu0
    %v176 = vadd.f32 %v91, %v175
    %v177 = vpop.f32.mrb[0].mxu0
    %v178 = vpop.f32.mrb[0].mxu0
    %v179 = vpop.f32.mrb[0].mxu0
    %180 = vdwg.mxu0
    %v181 = vmax.f32 %v176, 0.0
    %v182 = vpack.c.bf16 %v181, %v181
    %v183 = vld [vmem:[#allocation4] sm:$0xf]
    %v184 = vld [vmem:[#allocation4 + $0x4] sm:$0xf]
    %v185 = vld [vmem:[#allocation4 + $0x8] sm:$0xf]
    %v186 = vld [vmem:[#allocation4 + $0xc] sm:$0xf]
    %v187 = vld [vmem:[#allocation4 + $0x10] sm:$0xf]
    %v188 = vld [vmem:[#allocation4 + $0x14] sm:$0xf]
    %v189 = vld [vmem:[#allocation4 + $0x18] sm:$0xf]
    %v190 = vld [vmem:[#allocation4 + $0x1c] sm:$0xf]
    %v191 = vld [vmem:[#allocation4 + $0x20] sm:$0xf]
    %v192 = vld [vmem:[#allocation4 + $0x24] sm:$0xf]
    %v193 = vld [vmem:[#allocation4 + $0x28] sm:$0xf]
    %v194 = vld [vmem:[#allocation4 + $0x2c] sm:$0xf]
    %v195 = vld [vmem:[#allocation4 + $0x30] sm:$0xf]
    %v196 = vld [vmem:[#allocation4 + $0x34] sm:$0xf]
    %v197 = vld [vmem:[#allocation4 + $0x38] sm:$0xf]
    %v198 = vld [vmem:[#allocation4 + $0x3c] sm:$0xf]
    %v199 = vld [vmem:[%s4] sm:$0x1]
    %v201 = vlaneseq
    %v202 = vshrl.u32 %v201, 7
    %v203 = vsub.s32 0, %v202
    %v204 = vrot.slane %v199, %v203
    %v222 = vunpack.c.l.b16 %v183
    %v223 = vunpack.c.l.b16 %v184
    %v224 = vunpack.c.l.b16 %v185
    %v225 = vunpack.c.l.b16 %v186
    %v226 = vunpack.c.l.b16 %v187
    %v227 = vunpack.c.l.b16 %v188
    %v228 = vunpack.c.l.b16 %v189
    %v229 = vunpack.c.l.b16 %v190
    %v230 = vunpack.c.l.b16 %v191
    %v231 = vunpack.c.l.b16 %v192
    %v232 = vunpack.c.l.b16 %v193
    %v233 = vunpack.c.l.b16 %v194
    %v234 = vunpack.c.l.b16 %v195
    %v235 = vunpack.c.l.b16 %v196
    %v236 = vunpack.c.l.b16 %v197
    %v237 = vunpack.c.l.b16 %v198
    %v238 = vpack.c.b16 %v223, %v222
    %v239 = vpack.c.b16 %v225, %v224
    %v240 = vpack.c.b16 %v227, %v226
    %v241 = vpack.c.b16 %v229, %v228
    %v242 = vpack.c.b16 %v231, %v230
    %v243 = vpack.c.b16 %v233, %v232
    %v244 = vpack.c.b16 %v235, %v234
    %v245 = vpack.c.b16 %v237, %v236
    %254 = vmatprep.subr.bf16.mxu0 0
    %255 = vmatpush1.bf16.msra.mxu0 %v238
    %256 = vmatprep.subr.bf16.mxu0 0
    %257 = vmatpush1.bf16.msra.mxu0 %v239
    %258 = vmatprep.subr.bf16.mxu0 0
    %259 = vmatpush1.bf16.msra.mxu0 %v240
    %260 = vmatprep.subr.bf16.mxu0 0
    %261 = vmatpush1.bf16.msra.mxu0 %v241
    %262 = vmatprep.subr.bf16.mxu0 0
    %263 = vmatpush1.bf16.msra.mxu0 %v242
    %264 = vmatprep.subr.bf16.mxu0 0
    %265 = vmatpush1.bf16.msra.mxu0 %v243
    %266 = vmatprep.subr.bf16.mxu0 0
    %267 = vmatpush1.bf16.msra.mxu0 %v244
    %268 = vmatprep.subr.bf16.mxu0 0
    %269 = vmatpush1.bf16.msra.mxu0 %v245
    %270 = vmatprep.subr.bf16.mxu0 0
    %271 = vmatpush1.bf16.msra.mxu0 0
    %272 = vmatprep.subr.bf16.mxu0 0
    %273 = vmatpush1.bf16.msra.mxu0 0
    %274 = vmatprep.subr.bf16.mxu0 0
    %275 = vmatpush1.bf16.msra.mxu0 0
    %276 = vmatprep.subr.bf16.mxu0 0
    %277 = vmatpush1.bf16.msra.mxu0 0
    %278 = vmatprep.subr.bf16.mxu0 0
    %279 = vmatpush1.bf16.msra.mxu0 0
    %280 = vmatprep.subr.bf16.mxu0 0
    %281 = vmatpush1.bf16.msra.mxu0 0
    %282 = vmatprep.subr.bf16.mxu0 0
    %283 = vmatpush1.bf16.msra.mxu0 0
    %284 = vmatprep.subr.bf16.mxu0 0
    %285 = vmatpush1.bf16.msra.mxu0 0
    %286 = vmatprep.mubr.bf16.mxu0 0
    %287 = vmatmul.mubr.bf16.gmra.mrb[0].mxu0 %v182
    %v288 = vpop.f32.mrb[0].mxu0
    %v289 = vadd.f32 %v204, %v288
    %v290 = vpop.f32.mrb[0].mxu0
    %v291 = vpop.f32.mrb[0].mxu0
    %v292 = vpop.f32.mrb[0].mxu0
    %293 = vdwg.mxu0
    %v294 = vmax.f32 %v289, 0.0
    %v295 = vpack.c.bf16 %v294, %v294
    %v296 = vld [vmem:[#allocation6] sm:$0xf]
    %v297 = vld [vmem:[#allocation6 + $0x4] sm:$0xf]
    %v298 = vld [vmem:[#allocation6 + $0x8] sm:$0xf]
    %v299 = vld [vmem:[#allocation6 + $0xc] sm:$0xf]
    %v300 = vld [vmem:[#allocation6 + $0x10] sm:$0xf]
    %v301 = vld [vmem:[#allocation6 + $0x14] sm:$0xf]
    %v302 = vld [vmem:[#allocation6 + $0x18] sm:$0xf]
    %v303 = vld [vmem:[#allocation6 + $0x1c] sm:$0xf]
    %v304 = vld [vmem:[#allocation6 + $0x20] sm:$0xf]
    %v305 = vld [vmem:[#allocation6 + $0x24] sm:$0xf]
    %v306 = vld [vmem:[#allocation6 + $0x28] sm:$0xf]
    %v307 = vld [vmem:[#allocation6 + $0x2c] sm:$0xf]
    %v308 = vld [vmem:[#allocation6 + $0x30] sm:$0xf]
    %v309 = vld [vmem:[#allocation6 + $0x34] sm:$0xf]
    %v310 = vld [vmem:[#allocation6 + $0x38] sm:$0xf]
    %v311 = vld [vmem:[#allocation6 + $0x3c] sm:$0xf]
    %v312 = vld [vmem:[%s6] sm:$0x1]
    %v314 = vlaneseq
    %v315 = vshrl.u32 %v314, 7
    %v316 = vsub.s32 0, %v315
    %v317 = vrot.slane %v312, %v316
    %v335 = vunpack.c.l.b16 %v296
    %v336 = vunpack.c.l.b16 %v297
    %v337 = vunpack.c.l.b16 %v298
    %v338 = vunpack.c.l.b16 %v299
    %v339 = vunpack.c.l.b16 %v300
    %v340 = vunpack.c.l.b16 %v301
    %v341 = vunpack.c.l.b16 %v302
    %v342 = vunpack.c.l.b16 %v303
    %v343 = vunpack.c.l.b16 %v304
    %v344 = vunpack.c.l.b16 %v305
    %v345 = vunpack.c.l.b16 %v306
    %v346 = vunpack.c.l.b16 %v307
    %v347 = vunpack.c.l.b16 %v308
    %v348 = vunpack.c.l.b16 %v309
    %v349 = vunpack.c.l.b16 %v310
    %v350 = vunpack.c.l.b16 %v311
    %v351 = vpack.c.b16 %v336, %v335
    %v352 = vpack.c.b16 %v338, %v337
    %v353 = vpack.c.b16 %v340, %v339
    %v354 = vpack.c.b16 %v342, %v341
    %v355 = vpack.c.b16 %v344, %v343
    %v356 = vpack.c.b16 %v346, %v345
    %v357 = vpack.c.b16 %v348, %v347
    %v358 = vpack.c.b16 %v350, %v349
    %367 = vmatprep.subr.bf16.mxu0 0
    %368 = vmatpush1.bf16.msra.mxu0 %v351
    %369 = vmatprep.subr.bf16.mxu0 0
    %370 = vmatpush1.bf16.msra.mxu0 %v352
    %371 = vmatprep.subr.bf16.mxu0 0
    %372 = vmatpush1.bf16.msra.mxu0 %v353
    %373 = vmatprep.subr.bf16.mxu0 0
    %374 = vmatpush1.bf16.msra.mxu0 %v354
    %375 = vmatprep.subr.bf16.mxu0 0
    %376 = vmatpush1.bf16.msra.mxu0 %v355
    %377 = vmatprep.subr.bf16.mxu0 0
    %378 = vmatpush1.bf16.msra.mxu0 %v356
    %379 = vmatprep.subr.bf16.mxu0 0
    %380 = vmatpush1.bf16.msra.mxu0 %v357
    %381 = vmatprep.subr.bf16.mxu0 0
    %382 = vmatpush1.bf16.msra.mxu0 %v358
    %383 = vmatprep.subr.bf16.mxu0 0
    %384 = vmatpush1.bf16.msra.mxu0 0
    %385 = vmatprep.subr.bf16.mxu0 0
    %386 = vmatpush1.bf16.msra.mxu0 0
    %387 = vmatprep.subr.bf16.mxu0 0
    %388 = vmatpush1.bf16.msra.mxu0 0
    %389 = vmatprep.subr.bf16.mxu0 0
    %390 = vmatpush1.bf16.msra.mxu0 0
    %391 = vmatprep.subr.bf16.mxu0 0
    %392 = vmatpush1.bf16.msra.mxu0 0
    %393 = vmatprep.subr.bf16.mxu0 0
    %394 = vmatpush1.bf16.msra.mxu0 0
    %395 = vmatprep.subr.bf16.mxu0 0
    %396 = vmatpush1.bf16.msra.mxu0 0
    %397 = vmatprep.subr.bf16.mxu0 0
    %398 = vmatpush1.bf16.msra.mxu0 0
    %399 = vmatprep.mubr.bf16.mxu0 0
    %400 = vmatmul.mubr.bf16.gmra.mrb[0].mxu0 %v295
    %v401 = vpop.f32.mrb[0].mxu0
    %v402 = vadd.f32 %v317, %v401
    %v403 = vpop.f32.mrb[0].mxu0
    %v404 = vpop.f32.mrb[0].mxu0
    %v405 = vpop.f32.mrb[0].mxu0
    %406 = vdwg.mxu0
    %v407 = vsub.f32 0.0, %v402
    %v408 = vmul.f32 %v407, 1.442695
    %v409 = vpow.pop %v408
    %v410 = vadd.f32 %v409, 1.0
    %v411 = vrcp.pop %v410
    %412 = vst [vmem:[%s7] sm:$0xff] %v411
    // Predicated region
    $region42: #{mlp_forward.1} parent=1 // pred_check
      _
    $region43: #{mlp_forward.1} parent=1 // pred_check_branch
      %414 = sbr.rel (0) target = $region45
    $region44: #{mlp_forward.1} parent=1 // pred_region
      _
    $region45: #{mlp_forward.1} parent=1 // pred_fallthru
      _
    // Predicated region
    $region46: #{mlp_forward.1} parent=1 // pred_check
      _
    $region47: #{mlp_forward.1} parent=1 // pred_check_branch
      %416 = sbr.rel (0) target = $region49
    $region48: #{mlp_forward.1} parent=1 // pred_region
      _
    $region49: #{mlp_forward.1} parent=1 // pred_fallthru
      _
    %417 = vsyncpa [#allocation3], 1
    %418 = vsyncpa [#allocation5], 1

</llo_original>
